<compile_context>
chip_gen: v7x
topology: tpu7x:2x2x1
jax: 0.10.0
libtpu: 0.0.40
codegen_flags: <defaults>
</compile_context>

<pallas_src>
import functools

import jax
import jax.numpy as jnp
import numpy as np
from jax.experimental import pallas as pl
from jax.experimental.pallas import tpu as pltpu


def _condition_kernel(x_ref, w_ref, b_ref, out_ref, *, K):
    # x_ref  : (TILE_B, H)      bf16  activations (streamed per grid step)
    # w_ref  : (H, n_pad)       bf16  fused weight slab (VMEM-resident)
    # b_ref  : (1, n_pad)       f32   fused bias slab   (VMEM-resident)
    # out_ref: (TILE_B, n_pad)  f32   fused lane-dense output slab
    #
    # Slab columns: [0:K)=then logits, [K:2K)=else logits,
    #               [2K]=cond logit difference (True - False), rest zero pad.
    z = jnp.dot(x_ref[...], w_ref[...],
                preferred_element_type=jnp.float32) + b_ref[...]

    lane = jax.lax.broadcasted_iota(jnp.int32, z.shape, 1)
    in_then = lane < K
    in_else = jnp.logical_and(lane >= K, lane < 2 * K)
    neg = jnp.float32(-1e30)

    # Segment-masked, max-subtracted softmax computed on the full lane-dense
    # slab (no narrow lane slices; all vector ops stay full-width).
    m_then = jnp.max(jnp.where(in_then, z, neg), axis=-1, keepdims=True)
    m_else = jnp.max(jnp.where(in_else, z, neg), axis=-1, keepdims=True)
    shift = jnp.where(in_then, m_then, jnp.where(in_else, m_else, 0.0))
    e = jnp.exp(z - shift)
    e_then = jnp.where(in_then, e, 0.0)
    e_else = jnp.where(in_else, e, 0.0)
    # divide -> EUP reciprocal (separate VLIW slot from the VALU)
    p_then = e_then * pl.reciprocal(
        jnp.sum(e_then, axis=-1, keepdims=True), approx=True)
    p_else = e_else * pl.reciprocal(
        jnp.sum(e_else, axis=-1, keepdims=True), approx=True)

    # 2-symbol condition softmax == sigmoid of the logit difference (exact
    # identity): p(True) = 1 / (1 + exp(-(l_T - l_F))).
    cond_diff = jnp.sum(jnp.where(lane == 2 * K, z, 0.0),
                        axis=-1, keepdims=True)                    # (TILE_B, 1)
    p_true = pl.reciprocal(1.0 + jnp.exp(-cond_diff), approx=True)
    p_false = 1.0 - p_true

    # Gate branch tags by the condition probabilities and pack everything into
    # one lane-dense tile: [then*p_T | else*p_F | p_F | p_T | 0...].
    out = p_then * p_true + p_else * p_false
    out = out + jnp.where(lane == 2 * K, p_false, 0.0)
    out = out + jnp.where(lane == 2 * K + 1, p_true, 0.0)
    out_ref[...] = out


def condition_forward(x, w_cond, b_cond, w_then, b_then, w_else, b_else,
                      *, tile_b=512):
    B, H = x.shape
    K = w_then.shape[1]
    n_cols = 2 * K + 2
    n_pad = ((n_cols + 127) // 128) * 128            # lane-dense slab width

    # ---- fuse the three heads into one lane-dense weight / bias slab -------
    w_diff = (w_cond[:, 1] - w_cond[:, 0])[:, None]              # (H, 1)
    w_fused = jnp.zeros((H, n_pad), jnp.float32)
    w_fused = w_fused.at[:, 0:K].set(w_then)
    w_fused = w_fused.at[:, K:2 * K].set(w_else)
    w_fused = w_fused.at[:, 2 * K:2 * K + 1].set(w_diff)

    bc = b_cond.reshape(-1)
    b_fused = jnp.zeros((1, n_pad), jnp.float32)
    b_fused = b_fused.at[:, 0:K].set(b_then.reshape(1, K))
    b_fused = b_fused.at[:, K:2 * K].set(b_else.reshape(1, K))
    b_fused = b_fused.at[0, 2 * K].set(bc[1] - bc[0])

    # bf16 MXU inputs; f32 accumulation + f32 softmax/gating in the kernel.
    x_bf = x.astype(jnp.bfloat16)
    w_bf = w_fused.astype(jnp.bfloat16)

    # ---- batch tiling: x / out stream (double-buffered), weights resident --
    TILE_B = tile_b if B >= tile_b else max(8, ((B + 7) // 8) * 8)
    n_tiles = pl.cdiv(B, TILE_B)
    B_pad = n_tiles * TILE_B
    if B_pad != B:
        x_bf = jnp.pad(x_bf, ((0, B_pad - B), (0, 0)))

    cost = pl.CostEstimate(
        flops=int(2 * B_pad * H * n_pad + 8 * B_pad * n_cols),
        transcendentals=int(B_pad * (n_pad + 4)),
        bytes_accessed=int(x_bf.size * 2 + w_bf.size * 2 + b_fused.size * 4
                           + B_pad * n_pad * 4),
    )

    out = pl.pallas_call(
        functools.partial(_condition_kernel, K=K),
        out_shape=jax.ShapeDtypeStruct((B_pad, n_pad), jnp.float32),
        grid=(n_tiles,),
        in_specs=[
            pl.BlockSpec((TILE_B, H), lambda i: (i, 0)),    # x tile streams
            pl.BlockSpec((H, n_pad), lambda i: (0, 0)),     # fused W resident
            pl.BlockSpec((1, n_pad), lambda i: (0, 0)),     # fused b resident
        ],
        out_specs=pl.BlockSpec((TILE_B, n_pad), lambda i: (i, 0)),
        compiler_params=pltpu.CompilerParams(
            dimension_semantics=("parallel",),              # megacore / 2-TC v7x
            vmem_limit_bytes=32 * 1024 * 1024,
        ),
        cost_estimate=cost,
    )(x_bf, w_bf, b_fused)

    then_tags = out[:B, 0:K]
    else_tags = out[:B, K:2 * K]
    cond_tags = out[:B, 2 * K:2 * K + 2]                    # [p(False), p(True)]
    return then_tags, else_tags, cond_tags


def _reference(x, w_cond, b_cond, w_then, b_then, w_else, b_else):
    # Mirrors the PyTorch module semantics (NumPy, float64).
    def softmax(z):
        z = z - np.max(z, axis=-1, keepdims=True)
        e = np.exp(z)
        return e / np.sum(e, axis=-1, keepdims=True)

    cond = softmax(x @ w_cond + b_cond)              # (B, 2), symbols [False, True]
    then_tags = softmax(x @ w_then + b_then) * cond[:, 1:2]
    else_tags = softmax(x @ w_else + b_else) * cond[:, 0:1]
    return then_tags, else_tags, cond


if __name__ == "__main__":
    B, H, K = 8, 32, 16

    key = jax.random.PRNGKey(0)
    kx, kc, kt, ke = jax.random.split(key, 4)

    x = jax.random.normal(kx, (B, H), dtype=jnp.float32)

    # Deterministic parameter init (synthetic weights, no checkpoint load).
    w_cond = jax.random.normal(kc, (H, 2), dtype=jnp.float32) * 0.1
    b_cond = jnp.zeros((1, 2), dtype=jnp.float32)
    w_then = jax.random.normal(kt, (H, K), dtype=jnp.float32) * 0.1
    b_then = jnp.zeros((1, K), dtype=jnp.float32)
    w_else = jax.random.normal(ke, (H, K), dtype=jnp.float32) * 0.1
    b_else = jnp.zeros((1, K), dtype=jnp.float32)

    then_out, else_out, cond_out = condition_forward(
        x, w_cond, b_cond, w_then, b_then, w_else, b_else)
    jax.block_until_ready((then_out, else_out, cond_out))

    # Reference in float64 on bf16-rounded matmul inputs (matching the MXU
    # input dtype used by the kernel); biases exact.
    def as64(a):
        return np.asarray(jnp.asarray(a, jnp.bfloat16).astype(jnp.float32),
                          dtype=np.float64)

    ref_then, ref_else, ref_cond = _reference(
        as64(x), as64(w_cond), np.asarray(b_cond, np.float64),
        as64(w_then), np.asarray(b_then, np.float64),
        as64(w_else), np.asarray(b_else, np.float64))

    # Tolerance loosened for bf16 MXU inputs + approx EUP reciprocal.
    np.testing.assert_allclose(np.asarray(then_out), ref_then, rtol=1e-2, atol=1e-5)
    np.testing.assert_allclose(np.asarray(else_out), ref_else, rtol=1e-2, atol=1e-5)
    np.testing.assert_allclose(np.asarray(cond_out), ref_cond, rtol=1e-2, atol=1e-5)

    print("KERNEL_OK")
</pallas_src>

<mosaic_0001>
module attributes {stable_mosaic.version = 11 : i64} {
  func.func @_condition_kernel(%arg0: i32, %arg1: memref<8x32xbf16, #tpu.memory_space<vmem>>, %arg2: memref<32x128xbf16, #tpu.memory_space<vmem>>, %arg3: memref<1x128xf32, #tpu.memory_space<vmem>>, %arg4: memref<8x128xf32, #tpu.memory_space<vmem>>) attributes {dimension_semantics = [#tpu.dimension_semantics<parallel>], iteration_bounds = array<i64: 1>, scalar_prefetch = 0 : i64, scratch_operands = 0 : i64, tpu.core_type = #tpu.core_type<tc>, window_params = [{transform_indices = @transform_0, window_bounds = array<i64: 8, 32>}, {pipeline_mode = #tpu.pipeline_mode<synchronous>, transform_indices = @transform_1, window_bounds = array<i64: 32, 128>}, {pipeline_mode = #tpu.pipeline_mode<synchronous>, transform_indices = @transform_2, window_bounds = array<i64: 1, 128>}, {transform_indices = @transform_3, window_bounds = array<i64: 8, 128>}]} {
    %c0 = arith.constant 0 : index
    %c0_0 = arith.constant 0 : index
    %0 = vector.load %arg1[%c0, %c0_0] : memref<8x32xbf16, #tpu.memory_space<vmem>>, vector<8x32xbf16>
    %c0_1 = arith.constant 0 : index
    %c0_2 = arith.constant 0 : index
    %1 = vector.load %arg2[%c0_1, %c0_2] : memref<32x128xbf16, #tpu.memory_space<vmem>>, vector<32x128xbf16>
    %cst = arith.constant dense<0.000000e+00> : vector<8x128xf32>
    %2 = tpu.matmul %0, %1, %cst {dimension_numbers = #tpu.dot_dimension_numbers<[1], [0], [0], [1], [0, 0, 1, 1], [], []>} : vector<8x32xbf16>, vector<32x128xbf16>, vector<8x128xf32> -> vector<8x128xf32>
    %c0_3 = arith.constant 0 : index
    %c0_4 = arith.constant 0 : index
    %3 = vector.load %arg3[%c0_3, %c0_4] : memref<1x128xf32, #tpu.memory_space<vmem>>, vector<1x128xf32>
    %4 = vector.broadcast %3 : vector<1x128xf32> to vector<8x128xf32>
    %5 = arith.addf %2, %4 : vector<8x128xf32>
    %6 = tpu.iota {dimensions = array<i32: 1>} : vector<8x128xi32>
    %c16_i32 = arith.constant 16 : i32
    %7 = vector.broadcast %c16_i32 : i32 to vector<8x128xi32>
    %8 = arith.cmpi slt, %6, %7 : vector<8x128xi32>
    %c16_i32_5 = arith.constant 16 : i32
    %9 = vector.broadcast %c16_i32_5 : i32 to vector<8x128xi32>
    %10 = arith.cmpi sge, %6, %9 : vector<8x128xi32>
    %c32_i32 = arith.constant 32 : i32
    %11 = vector.broadcast %c32_i32 : i32 to vector<8x128xi32>
    %12 = arith.cmpi slt, %6, %11 : vector<8x128xi32>
    %13 = arith.andi %10, %12 : vector<8x128xi1>
    %cst_6 = arith.constant -1.000000e+30 : f32
    %14 = vector.broadcast %cst_6 : f32 to vector<8x128xf32>
    %15 = arith.select %8, %5, %14 : vector<8x128xi1>, vector<8x128xf32>
    %cst_7 = arith.constant dense<0xFF800000> : vector<8xf32>
    %16 = vector.multi_reduction <maximumf>, %15, %cst_7 [1] : vector<8x128xf32> to vector<8xf32>
    %17 = vector.shape_cast %16 : vector<8xf32> to vector<8x1xf32>
    %cst_8 = arith.constant -1.000000e+30 : f32
    %18 = vector.broadcast %cst_8 : f32 to vector<8x128xf32>
    %19 = arith.select %13, %5, %18 : vector<8x128xi1>, vector<8x128xf32>
    %cst_9 = arith.constant dense<0xFF800000> : vector<8xf32>
    %20 = vector.multi_reduction <maximumf>, %19, %cst_9 [1] : vector<8x128xf32> to vector<8xf32>
    %21 = vector.shape_cast %20 : vector<8xf32> to vector<8x1xf32>
    %cst_10 = arith.constant 0.000000e+00 : f32
    %22 = vector.shape_cast %21 : vector<8x1xf32> to vector<8x1xf32>
    %23 = vector.broadcast %22 : vector<8x1xf32> to vector<8x128xf32>
    %24 = vector.broadcast %cst_10 : f32 to vector<8x128xf32>
    %25 = arith.select %13, %23, %24 : vector<8x128xi1>, vector<8x128xf32>
    %26 = vector.shape_cast %17 : vector<8x1xf32> to vector<8x1xf32>
    %27 = vector.broadcast %26 : vector<8x1xf32> to vector<8x128xf32>
    %28 = arith.select %8, %27, %25 : vector<8x128xi1>, vector<8x128xf32>
    %29 = arith.subf %5, %28 : vector<8x128xf32>
    %30 = math.exp %29 : vector<8x128xf32>
    %cst_11 = arith.constant 0.000000e+00 : f32
    %31 = vector.broadcast %cst_11 : f32 to vector<8x128xf32>
    %32 = arith.select %8, %30, %31 : vector<8x128xi1>, vector<8x128xf32>
    %cst_12 = arith.constant 0.000000e+00 : f32
    %33 = vector.broadcast %cst_12 : f32 to vector<8x128xf32>
    %34 = arith.select %13, %30, %33 : vector<8x128xi1>, vector<8x128xf32>
    %cst_13 = arith.constant dense<0.000000e+00> : vector<8xf32>
    %35 = vector.multi_reduction <add>, %32, %cst_13 [1] : vector<8x128xf32> to vector<8xf32>
    %36 = vector.shape_cast %35 : vector<8xf32> to vector<8x1xf32>
    %37 = tpu.reciprocal %36 {approx = true} : vector<8x1xf32> -> vector<8x1xf32>
    %38 = vector.broadcast %37 : vector<8x1xf32> to vector<8x128xf32>
    %39 = arith.mulf %32, %38 : vector<8x128xf32>
    %cst_14 = arith.constant dense<0.000000e+00> : vector<8xf32>
    %40 = vector.multi_reduction <add>, %34, %cst_14 [1] : vector<8x128xf32> to vector<8xf32>
    %41 = vector.shape_cast %40 : vector<8xf32> to vector<8x1xf32>
    %42 = tpu.reciprocal %41 {approx = true} : vector<8x1xf32> -> vector<8x1xf32>
    %43 = vector.broadcast %42 : vector<8x1xf32> to vector<8x128xf32>
    %44 = arith.mulf %34, %43 : vector<8x128xf32>
    %c32_i32_15 = arith.constant 32 : i32
    %45 = vector.broadcast %c32_i32_15 : i32 to vector<8x128xi32>
    %46 = arith.cmpi eq, %6, %45 : vector<8x128xi32>
    %cst_16 = arith.constant 0.000000e+00 : f32
    %47 = vector.broadcast %cst_16 : f32 to vector<8x128xf32>
    %48 = arith.select %46, %5, %47 : vector<8x128xi1>, vector<8x128xf32>
    %cst_17 = arith.constant dense<0.000000e+00> : vector<8xf32>
    %49 = vector.multi_reduction <add>, %48, %cst_17 [1] : vector<8x128xf32> to vector<8xf32>
    %50 = vector.shape_cast %49 : vector<8xf32> to vector<8x1xf32>
    %cst_18 = arith.constant 0.000000e+00 : f32
    %51 = vector.broadcast %cst_18 : f32 to vector<8x1xf32>
    %52 = arith.subf %51, %50 : vector<8x1xf32>
    %53 = math.exp %52 : vector<8x1xf32>
    %cst_19 = arith.constant 1.000000e+00 : f32
    %54 = vector.broadcast %cst_19 : f32 to vector<8x1xf32>
    %55 = arith.addf %54, %53 : vector<8x1xf32>
    %56 = tpu.reciprocal %55 {approx = true} : vector<8x1xf32> -> vector<8x1xf32>
    %cst_20 = arith.constant 1.000000e+00 : f32
    %57 = vector.broadcast %cst_20 : f32 to vector<8x1xf32>
    %58 = arith.subf %57, %56 : vector<8x1xf32>
    %59 = vector.broadcast %56 : vector<8x1xf32> to vector<8x128xf32>
    %60 = arith.mulf %39, %59 : vector<8x128xf32>
    %61 = vector.broadcast %58 : vector<8x1xf32> to vector<8x128xf32>
    %62 = arith.mulf %44, %61 : vector<8x128xf32>
    %63 = arith.addf %60, %62 : vector<8x128xf32>
    %c32_i32_21 = arith.constant 32 : i32
    %64 = vector.broadcast %c32_i32_21 : i32 to vector<8x128xi32>
    %65 = arith.cmpi eq, %6, %64 : vector<8x128xi32>
    %cst_22 = arith.constant 0.000000e+00 : f32
    %66 = vector.shape_cast %58 : vector<8x1xf32> to vector<8x1xf32>
    %67 = vector.broadcast %66 : vector<8x1xf32> to vector<8x128xf32>
    %68 = vector.broadcast %cst_22 : f32 to vector<8x128xf32>
    %69 = arith.select %65, %67, %68 : vector<8x128xi1>, vector<8x128xf32>
    %70 = arith.addf %63, %69 : vector<8x128xf32>
    %c33_i32 = arith.constant 33 : i32
    %71 = vector.broadcast %c33_i32 : i32 to vector<8x128xi32>
    %72 = arith.cmpi eq, %6, %71 : vector<8x128xi32>
    %cst_23 = arith.constant 0.000000e+00 : f32
    %73 = vector.shape_cast %56 : vector<8x1xf32> to vector<8x1xf32>
    %74 = vector.broadcast %73 : vector<8x1xf32> to vector<8x128xf32>
    %75 = vector.broadcast %cst_23 : f32 to vector<8x128xf32>
    %76 = arith.select %72, %74, %75 : vector<8x128xi1>, vector<8x128xf32>
    %77 = arith.addf %70, %76 : vector<8x128xf32>
    %c0_24 = arith.constant 0 : index
    %c0_25 = arith.constant 0 : index
    %78 = vector.load %arg4[%c0_24, %c0_25] : memref<8x128xf32, #tpu.memory_space<vmem>>, vector<8x128xf32>
    tpu.vector_store %arg4[%c0_24, %c0_25], %77 {strides = array<i32>} : memref<8x128xf32, #tpu.memory_space<vmem>>, vector<8x128xf32>,
    return
  }
  func.func @transform_0(%arg0: i32) -> (i32, i32) {
    %c0_i32 = arith.constant 0 : i32
    %c0_i32_0 = arith.constant 0 : i32
    return %arg0, %c0_i32 : i32, i32
  }
  func.func @transform_1(%arg0: i32) -> (i32, i32) {
    %c0_i32 = arith.constant 0 : i32
    %c0_i32_0 = arith.constant 0 : i32
    %c0_i32_1 = arith.constant 0 : i32
    return %c0_i32, %c0_i32_0 : i32, i32
  }
  func.func @transform_2(%arg0: i32) -> (i32, i32) {
    %c0_i32 = arith.constant 0 : i32
    %c0_i32_0 = arith.constant 0 : i32
    %c0_i32_1 = arith.constant 0 : i32
    return %c0_i32, %c0_i32_0 : i32, i32
  }
  func.func @transform_3(%arg0: i32) -> (i32, i32) {
    %c0_i32 = arith.constant 0 : i32
    %c0_i32_0 = arith.constant 0 : i32
    return %arg0, %c0_i32 : i32, i32
  }
}

</mosaic_0001>

<llo_original>
// kernel: tpu_custom_call.1
$region0: #{tpu_custom_call.1}
  #allocation0 [shape = 'u32[]', space=smem, size = 0x4, offset = 0x4, fixed_abs, tag = 'smem constant byte address 0x4 - core index']
  #allocation1 [shape = 'u32[144,128]{1,0:T(1,128)}', space=vmem, size = 0x12000, scoped, tag = 'internal scratch']
  %s0 = inlined_call_operand.hbm [shape: bf16[8,32], index: 0, kind: input, shape index: {}]
  %s1 = inlined_call_operand.hbm [shape: bf16[32,128], index: 1, kind: input, shape index: {}]
  %s2 = inlined_call_operand.vmem [shape: f32[1,128], index: 2, kind: input, shape index: {}]
  %s3 = inlined_call_operand.hbm [shape: f32[8,128], index: 3, kind: output, shape index: {}]
  %s4 = sld [smem:[#allocation0]]
  $region30: #{tpu_custom_call.1} parent=0
    _
  %s6 = ssub.s32 1, %s4
  %s7 = scalar_select 0, %s6, %s4
  $region1: #{tpu_custom_call.1} parent=0
    #allocation2 [shape = 'u8[2048]{0}', space=vmem, size = 0x800, scoped, tag = 'input window, operand 0, single buffered']
    #allocation3 [shape = 's32[1]{0}', space=sflag, size = 0x4, scoped, tag = 'scoped memory for tpu_custom_call.1']
    #allocation4 [shape = 's32[1]{0}', space=sflag, size = 0x4, scoped, tag = 'scoped memory for tpu_custom_call.1']
    #allocation5 [shape = 'u8[8192]{0}', space=vmem, size = 0x2000, scoped, tag = 'input window, operand 1, single buffered']
    #allocation6 [shape = 's32[1]{0}', space=sflag, size = 0x4, scoped, tag = 'scoped memory for tpu_custom_call.1']
    #allocation7 [shape = 'u8[4096]{0}', space=vmem, size = 0x1000, scoped, tag = 'output window, operand 0, single buffered']
    %8 = vsyncpa [#allocation3], 0
    %9 = vsyncpa [#allocation6], 0
    %10 = vsyncpa [#allocation4], 0
    // Predicated region
    $region2: #{tpu_custom_call.1} parent=1 // pred_check
      _
    $region3: #{tpu_custom_call.1} parent=1 // pred_check_branch
      %12 = sbr.rel (0) target = $region5
    $region4: #{tpu_custom_call.1} parent=1 // pred_region
      %s14 = ssub.s32 64, 64
      %15 = vsyncadd [#allocation3], %s14
      %s17 = sshll.u32 [#allocation2], 4
      %s18 = int_to_ptr.vmem [resolvable:$true] %s17
      %20 = dma.hbm_to_vmem [thread:$0]  %s0, 64, %s18, [#allocation3]
    $region5: #{tpu_custom_call.1} parent=1 // pred_fallthru
      _
    // Predicated region
    $region6: #{tpu_custom_call.1} parent=1 // pred_check
      _
    $region7: #{tpu_custom_call.1} parent=1 // pred_check_branch
      %22 = sbr.rel (0) target = $region9
    $region8: #{tpu_custom_call.1} parent=1 // pred_region
      %s24 = ssub.s32 256, 256
      %25 = vsyncadd [#allocation6], %s24
      %s26 = sshll.u32 [#allocation5], 4
      %s27 = int_to_ptr.vmem [resolvable:$true] %s26
      %32 = dma.hbm_to_vmem [thread:$0]  %s1, 256, %s27, [#allocation6], 64, 64, 4
    $region9: #{tpu_custom_call.1} parent=1 // pred_fallthru
      _
    // Predicated region
    $region10: #{tpu_custom_call.1} parent=1 // pred_check
      _
    $region11: #{tpu_custom_call.1} parent=1 // pred_check_branch
      %34 = sbr.rel (0) target = $region13
    $region12: #{tpu_custom_call.1} parent=1 // pred_region
      _
    $region13: #{tpu_custom_call.1} parent=1 // pred_fallthru
      _
    // Predicated region
    $region14: #{tpu_custom_call.1} parent=1 // pred_check
      _
    $region15: #{tpu_custom_call.1} parent=1 // pred_check_branch
      %36 = sbr.rel (0) target = $region17
    $region16: #{tpu_custom_call.1} parent=1 // pred_region
      %37 = dma.done [#allocation3], 64
    $region17: #{tpu_custom_call.1} parent=1 // pred_fallthru
      _
    // Predicated region
    $region18: #{tpu_custom_call.1} parent=1 // pred_check
      _
    $region19: #{tpu_custom_call.1} parent=1 // pred_check_branch
      %39 = sbr.rel (0) target = $region21
    $region20: #{tpu_custom_call.1} parent=1 // pred_region
      %40 = dma.done [#allocation6], 256
    $region21: #{tpu_custom_call.1} parent=1 // pred_fallthru
      _
    %v42 = vld [vmem:[#allocation2] sm:$0xf]
    %v43 = vld [vmem:[#allocation5] sm:$0xf]
    %v44 = vld [vmem:[#allocation5 + $0x4] sm:$0xf]
    %v45 = vld [vmem:[#allocation5 + $0x8] sm:$0xf]
    %v46 = vld [vmem:[#allocation5 + $0xc] sm:$0xf]
    %v47 = vld [vmem:[%s2] sm:$0x1]
    %v49 = vlaneseq
    %v50 = vshrl.u32 %v49, 7
    %v51 = vsub.s32 0, %v50
    %v52 = vrot.slane %v47, %v51
    %v58 = vunpack.c.l.b16 %v43
    %v59 = vunpack.c.l.b16 %v44
    %v60 = vunpack.c.l.b16 %v45
    %v61 = vunpack.c.l.b16 %v46
    %v62 = vpack.c.b16 %v59, %v58
    %v63 = vpack.c.b16 %v61, %v60
    %vm66 = vcmask 261120
    %v68 = vsel %vm66, %v42, 0
    %70 = vmatprep.subr.bf16.mxu0 0
    %71 = vmatpush1.bf16.msra.mxu0 %v62
    %72 = vmatprep.subr.bf16.mxu0 0
    %73 = vmatpush1.bf16.msra.mxu0 %v63
    %74 = vmatprep.subr.bf16.mxu0 0
    %75 = vmatpush1.bf16.msra.mxu0 0
    %76 = vmatprep.subr.bf16.mxu0 0
    %77 = vmatpush1.bf16.msra.mxu0 0
    %78 = vmatprep.subr.bf16.mxu0 0
    %79 = vmatpush1.bf16.msra.mxu0 0
    %80 = vmatprep.subr.bf16.mxu0 0
    %81 = vmatpush1.bf16.msra.mxu0 0
    %82 = vmatprep.subr.bf16.mxu0 0
    %83 = vmatpush1.bf16.msra.mxu0 0
    %84 = vmatprep.subr.bf16.mxu0 0
    %85 = vmatpush1.bf16.msra.mxu0 0
    %86 = vmatprep.subr.bf16.mxu0 0
    %87 = vmatpush1.bf16.msra.mxu0 0
    %88 = vmatprep.subr.bf16.mxu0 0
    %89 = vmatpush1.bf16.msra.mxu0 0
    %90 = vmatprep.subr.bf16.mxu0 0
    %91 = vmatpush1.bf16.msra.mxu0 0
    %92 = vmatprep.subr.bf16.mxu0 0
    %93 = vmatpush1.bf16.msra.mxu0 0
    %94 = vmatprep.subr.bf16.mxu0 0
    %95 = vmatpush1.bf16.msra.mxu0 0
    %96 = vmatprep.subr.bf16.mxu0 0
    %97 = vmatpush1.bf16.msra.mxu0 0
    %98 = vmatprep.subr.bf16.mxu0 0
    %99 = vmatpush1.bf16.msra.mxu0 0
    %100 = vmatprep.subr.bf16.mxu0 0
    %101 = vmatpush1.bf16.msra.mxu0 0
    %102 = vmatprep.mubr.bf16.mxu0 0
    %103 = vmatmul.mubr.bf16.gmra.mrb[0].mxu0 %v68
    %v104 = vpop.f32.mrb[0].mxu0
    %v105 = vadd.f32 %v52, %v104
    %v106 = vpop.f32.mrb[0].mxu0
    %v107 = vpop.f32.mrb[0].mxu0
    %v108 = vpop.f32.mrb[0].mxu0
    %109 = vdwg.mxu0
    %v110 = vlaneseq
    %v111 = vand.u32 %v110, 127
    %vm112 = vcmp.lt.s32.totalorder %v111, 16
    %vm113 = vcmp.ge.s32.totalorder %v111, 16
    %vm114 = vcmp.lt.s32.totalorder %v111, 32
    %vm115 = vmand %vm113, %vm114
    %v116 = vsel %vm112, %v105, -1e+30
    %117 = vmax.xlane.f32.xlu0 %v116
    %v118 = vpop.xlane.xlu0 %117
    %v119 = vsel %vm115, %v105, -1e+30
    %120 = vmax.xlane.f32.xlu0 %v119
    %v121 = vpop.xlane.xlu0 %120
    %v122 = vsel %vm115, %v121, 0.0
    %v123 = vsel %vm112, %v118, %v122
    %v124 = vsub.f32 %v105, %v123
    %v125 = vmul.f32 %v124, 1.442695
    %v126 = vpow.pop %v125
    %v127 = vsel %vm112, %v126, 0.0
    %v128 = vsel %vm115, %v126, 0.0
    %129 = vadd.xlane.f32.xlu0 %v127
    %v130 = vpop.xlane.xlu0 %129
    %v131 = vrcp.pop %v130
    %v132 = vmul.f32 %v127, %v131
    %133 = vadd.xlane.f32.xlu0 %v128
    %v134 = vpop.xlane.xlu0 %133
    %v135 = vrcp.pop %v134
    %v136 = vmul.f32 %v128, %v135
    %vm137 = vcmp.eq.s32.totalorder %v111, 32
    %v138 = vsel %vm137, %v105, 0.0
    %139 = vadd.xlane.f32.xlu0 %v138
    %v140 = vpop.xlane.xlu0 %139
    %v141 = vsub.f32 0.0, %v140
    %v142 = vmul.f32 %v141, 1.442695
    %v143 = vpow.pop %v142
    %v144 = vadd.f32 %v143, 1.0
    %v145 = vrcp.pop %v144
    %v146 = vsub.f32 1.0, %v145
    %v147 = vmul.f32 %v132, %v145
    %v148 = vmul.f32 %v136, %v146
    %v149 = vadd.f32 %v147, %v148
    %v150 = vsel %vm137, %v146, 0.0
    %v151 = vadd.f32 %v149, %v150
    %vm152 = vcmp.eq.s32.totalorder %v111, 33
    %v153 = vsel %vm152, %v145, 0.0
    %v154 = vadd.f32 %v151, %v153
    %155 = vst [vmem:[#allocation7] sm:$0xff] %v154
    // Predicated region
    $region22: #{tpu_custom_call.1} parent=1 // pred_check
      _
    $region23: #{tpu_custom_call.1} parent=1 // pred_check_branch
      %157 = sbr.rel (0) target = $region25
    $region24: #{tpu_custom_call.1} parent=1 // pred_region
      %s159 = ssub.s32 128, 128
      %160 = vsyncadd [#allocation4], %s159
      %s162 = sshll.u32 [#allocation7], 4
      %s163 = int_to_ptr.vmem [resolvable:$true] %s162
      %165 = dma.vmem_to_hbm [thread:$0]  %s163, 128, %s3, [#allocation4]
    $region25: #{tpu_custom_call.1} parent=1 // pred_fallthru
      _
    // Predicated region
    $region26: #{tpu_custom_call.1} parent=1 // pred_check
      _
    $region27: #{tpu_custom_call.1} parent=1 // pred_check_branch
      %167 = sbr.rel (0) target = $region29
    $region28: #{tpu_custom_call.1} parent=1 // pred_region
      %168 = dma.done [#allocation4], 128
    $region29: #{tpu_custom_call.1} parent=1 // pred_fallthru
      _
    %169 = vsyncpa [#allocation3], 1
    %170 = vsyncpa [#allocation6], 1
    %171 = vsyncpa [#allocation4], 1

</llo_original>
